<compile_context>
chip_gen: v6e
topology: v6e:2x2x1
jax: 0.10.0
libtpu: 0.0.40
codegen_flags: <defaults>
</compile_context>

<pallas_src>
import functools

import jax
import jax.numpy as jnp
from jax.experimental import pallas as pl
from jax.experimental.pallas import tpu as pltpu


def _selfatt_kernel(x_ref, gamma_ref, beta_ref, wqkv_ref, wproj_ref, bproj_ref,
                    o_ref, *, num_heads, norm_groups, eps, n_valid):
    x = x_ref[0]                                            # (C, Np) float32
    C, Np = x.shape
    G = norm_groups
    CG = C // G
    H = num_heads
    D = C // H

    # ---- GroupNorm: one lane-reduction pass + tiny per-group combines ----
    row_sum = jnp.sum(x, axis=-1, keepdims=True)            # (C, 1)
    row_sq = jnp.sum(x * x, axis=-1, keepdims=True)         # (C, 1)
    gamma = gamma_ref[...]                                  # (C, 1), loaded once
    beta = beta_ref[...]                                    # (C, 1)
    cnt = float(CG * n_valid)
    scale_parts, shift_parts = [], []
    for g in range(G):
        sl = slice(g * CG, (g + 1) * CG)
        mean_g = jnp.sum(row_sum[sl, :]) / cnt
        ex2_g = jnp.sum(row_sq[sl, :]) / cnt
        var_g = ex2_g - mean_g * mean_g
        inv_g = jax.lax.rsqrt(var_g + eps)
        gam = gamma[sl, :]
        scale_parts.append(gam * inv_g)                     # (CG, 1)
        shift_parts.append(beta[sl, :] - gam * (mean_g * inv_g))
    scale = jnp.concatenate(scale_parts, axis=0)            # (C, 1)  (tiny)
    shift = jnp.concatenate(shift_parts, axis=0)            # (C, 1)
    xn = x * scale + shift                                  # single fused VPU pass

    # ---- QKV 1x1 conv (bf16 MXU, f32 accumulate) ----
    qkv = jnp.dot(wqkv_ref[...], xn.astype(jnp.bfloat16),
                  preferred_element_type=jnp.float32)       # (3C, Np) f32
    q3 = qkv[0:C, :].reshape(H, D, Np)
    k3 = qkv[C:2 * C, :].reshape(H, D, Np)
    v3 = qkv[2 * C:3 * C, :].reshape(H, D, Np)

    # ---- softmax(keys) over spatial (mask lane padding) ----
    if n_valid != Np:
        lane = jax.lax.broadcasted_iota(jnp.int32, (H, D, Np), 2)
        k3 = jnp.where(lane < n_valid, k3, -1e30)
    kmax = jnp.max(k3, axis=-1, keepdims=True)              # (H, D, 1)
    ek = jnp.exp(k3 - kmax)                                 # (H, D, Np); pads -> 0
    ksum = jnp.sum(ek, axis=-1, keepdims=True)              # (H, D, 1)
    # fold the softmax denominator into q (EUP approx reciprocal, lane broadcast)
    qs = q3 * pl.reciprocal(ksum, approx=True)              # (H, D, Np)

    # ---- batched, transpose-free attention (bf16 MXU, f32 accumulate) ----
    # att_t[h, e, d] = sum_n v[h, e, n] * ek[h, d, n]
    att_t = jnp.einsum('hen,hdn->hed',
                       v3.astype(jnp.bfloat16), ek.astype(jnp.bfloat16),
                       preferred_element_type=jnp.float32)  # (H, D, D)
    # out[h, e, n] = sum_d att_t[h, e, d] * (q[h, d, n] / ksum[h, d])
    out3 = jnp.einsum('hed,hdn->hen',
                      att_t.astype(jnp.bfloat16), qs.astype(jnp.bfloat16),
                      preferred_element_type=jnp.float32)   # (H, D, Np)
    out = out3.reshape(C, Np)

    # ---- proj 1x1 conv with bias (bf16 MXU, f32 accumulate) ----
    y = jnp.dot(wproj_ref[...], out.astype(jnp.bfloat16),
                preferred_element_type=jnp.float32)
    y = y + bproj_ref[...]                                  # (C, 1) bias
    o_ref[0] = y.astype(o_ref.dtype)


def self_att_pallas(x, gamma, beta, w_qkv, w_proj, b_proj, *,
                    num_heads, norm_groups, eps=1e-5):
    """x: (B, C, H, W) float32. Returns (B, C, H, W)."""
    B, C, Hh, Ww = x.shape
    N = Hh * Ww
    Np = max(128, ((N + 127) // 128) * 128)   # lane-dense spatial dim
    x_flat = x.reshape(B, C, N)
    if Np != N:
        x_flat = jnp.pad(x_flat, ((0, 0), (0, 0), (0, Np - N)))

    gamma2 = gamma.reshape(C, 1).astype(jnp.float32)
    beta2 = beta.reshape(C, 1).astype(jnp.float32)
    bproj2 = b_proj.reshape(C, 1).astype(jnp.float32)
    # Weights cast once to bf16 for the MXU (halves VMEM + DMA for weights).
    wqkv_b = w_qkv.astype(jnp.bfloat16)
    wproj_b = w_proj.astype(jnp.bfloat16)

    kernel = functools.partial(_selfatt_kernel, num_heads=num_heads,
                               norm_groups=norm_groups, eps=eps, n_valid=N)

    out = pl.pallas_call(
        kernel,
        out_shape=jax.ShapeDtypeStruct((B, C, Np), x.dtype),
        grid_spec=pltpu.PrefetchScalarGridSpec(
            num_scalar_prefetch=0,
            grid=(B,),
            in_specs=[
                pl.BlockSpec((1, C, Np), lambda i: (i, 0, 0)),      # x
                pl.BlockSpec((C, 1), lambda i: (0, 0)),             # gamma
                pl.BlockSpec((C, 1), lambda i: (0, 0)),             # beta
                pl.BlockSpec((3 * C, C), lambda i: (0, 0)),         # W_qkv (bf16)
                pl.BlockSpec((C, C), lambda i: (0, 0)),             # W_proj (bf16)
                pl.BlockSpec((C, 1), lambda i: (0, 0)),             # b_proj
            ],
            out_specs=pl.BlockSpec((1, C, Np), lambda i: (i, 0, 0)),
        ),
        compiler_params=pltpu.CompilerParams(
            dimension_semantics=("parallel",),
            vmem_limit_bytes=64 * 1024 * 1024),
    )(x_flat, gamma2, beta2, wqkv_b, wproj_b, bproj2)

    if Np != N:
        out = out[:, :, :N]
    return out.reshape(B, C, Hh, Ww)


def self_att_ref(x, gamma, beta, w_qkv, w_proj, b_proj, *,
                 num_heads, norm_groups, eps=1e-5):
    """Pure-JAX f32 reference mirroring the PyTorch forward."""
    B, C, Hh, Ww = x.shape
    N = Hh * Ww
    G = norm_groups
    D = C // num_heads
    xg = x.reshape(B, G, (C // G) * N)
    mu = jnp.mean(xg, axis=-1, keepdims=True)
    var = jnp.mean((xg - mu) ** 2, axis=-1, keepdims=True)
    xn = ((xg - mu) / jnp.sqrt(var + eps)).reshape(B, C, N)
    xn = xn * gamma[None, :, None] + beta[None, :, None]
    qkv = jnp.einsum('oc,bcn->bon', w_qkv, xn)                      # (B, 3C, N)
    qkv = qkv.reshape(B, 3, num_heads, D, N).transpose(1, 0, 2, 3, 4)
    q, k, v = qkv[0], qkv[1], qkv[2]                                # (B, H, D, N)
    k = jax.nn.softmax(k, axis=-1)
    att = jnp.einsum('bhdn,bhen->bhde', k, v)
    out = jnp.einsum('bhde,bhdn->bhen', att, q)
    out = out.reshape(B, C, N)
    y = jnp.einsum('oc,bcn->bon', w_proj, out) + b_proj[None, :, None]
    return y.reshape(B, C, Hh, Ww)


if __name__ == "__main__":
    B, C, Hh, Ww = 2, 32, 8, 8
    NUM_HEADS, NORM_GROUPS = 4, 4

    key = jax.random.PRNGKey(0)
    kx, kqkv, kproj, kbias = jax.random.split(key, 4)

    x = jax.random.normal(kx, (B, C, Hh, Ww), dtype=jnp.float32)

    # Deterministic parameter init (GroupNorm defaults: gamma=1, beta=0).
    gamma = jnp.ones((C,), jnp.float32)
    beta = jnp.zeros((C,), jnp.float32)
    w_qkv = 0.1 * jax.random.normal(kqkv, (3 * C, C), dtype=jnp.float32)
    w_proj = 0.1 * jax.random.normal(kproj, (C, C), dtype=jnp.float32)
    b_proj = 0.1 * jax.random.normal(kbias, (C,), dtype=jnp.float32)

    out = self_att_pallas(x, gamma, beta, w_qkv, w_proj, b_proj,
                          num_heads=NUM_HEADS, norm_groups=NORM_GROUPS)
    out = jax.block_until_ready(out)

    ref = self_att_ref(x, gamma, beta, w_qkv, w_proj, b_proj,
                       num_heads=NUM_HEADS, norm_groups=NORM_GROUPS)
    assert out.shape == (B, C, Hh, Ww)
    # bf16 MXU matmuls (f32 accumulation) + approx reciprocal -> looser tolerance
    # than the pure-f32 version.
    max_err = jnp.max(jnp.abs(out - ref))
    assert jnp.allclose(out, ref, atol=2.5e-2, rtol=2.5e-2), f"max err {max_err}"
    print("KERNEL_OK")
</pallas_src>

<mosaic_0001>
module attributes {stable_mosaic.version = 11 : i64} {
  func.func @_selfatt_kernel(%arg0: i32, %arg1: memref<1x32x128xf32, #tpu.memory_space<vmem>>, %arg2: memref<32x1xf32, #tpu.memory_space<vmem>>, %arg3: memref<32x1xf32, #tpu.memory_space<vmem>>, %arg4: memref<96x32xbf16, #tpu.memory_space<vmem>>, %arg5: memref<32x32xbf16, #tpu.memory_space<vmem>>, %arg6: memref<32x1xf32, #tpu.memory_space<vmem>>, %arg7: memref<1x32x128xf32, #tpu.memory_space<vmem>>) attributes {dimension_semantics = [#tpu.dimension_semantics<parallel>], iteration_bounds = array<i64: 2>, scalar_prefetch = 0 : i64, scratch_operands = 0 : i64, tpu.core_type = #tpu.core_type<tc>, window_params = [{transform_indices = @transform_0, window_bounds = array<i64: 1, 32, 128>}, {pipeline_mode = #tpu.pipeline_mode<synchronous>, transform_indices = @transform_1, window_bounds = array<i64: 32, 1>}, {pipeline_mode = #tpu.pipeline_mode<synchronous>, transform_indices = @transform_2, window_bounds = array<i64: 32, 1>}, {pipeline_mode = #tpu.pipeline_mode<synchronous>, transform_indices = @transform_3, window_bounds = array<i64: 96, 32>}, {pipeline_mode = #tpu.pipeline_mode<synchronous>, transform_indices = @transform_4, window_bounds = array<i64: 32, 32>}, {pipeline_mode = #tpu.pipeline_mode<synchronous>, transform_indices = @transform_5, window_bounds = array<i64: 32, 1>}, {transform_indices = @transform_6, window_bounds = array<i64: 1, 32, 128>}]} {
    %c0 = arith.constant 0 : index
    %c0_0 = arith.constant 0 : index
    %c0_1 = arith.constant 0 : index
    %0 = vector.load %arg1[%c0, %c0_0, %c0_1] : memref<1x32x128xf32, #tpu.memory_space<vmem>>, vector<1x32x128xf32>
    %1 = vector.shape_cast %0 : vector<1x32x128xf32> to vector<32x128xf32>
    %cst = arith.constant dense<0.000000e+00> : vector<32xf32>
    %2 = vector.multi_reduction <add>, %1, %cst [1] : vector<32x128xf32> to vector<32xf32>
    %3 = vector.shape_cast %2 : vector<32xf32> to vector<32x1xf32>
    %4 = arith.mulf %1, %1 : vector<32x128xf32>
    %cst_2 = arith.constant dense<0.000000e+00> : vector<32xf32>
    %5 = vector.multi_reduction <add>, %4, %cst_2 [1] : vector<32x128xf32> to vector<32xf32>
    %6 = vector.shape_cast %5 : vector<32xf32> to vector<32x1xf32>
    %c0_3 = arith.constant 0 : index
    %c0_4 = arith.constant 0 : index
    %7 = vector.load %arg2[%c0_3, %c0_4] : memref<32x1xf32, #tpu.memory_space<vmem>>, vector<32x1xf32>
    %c0_5 = arith.constant 0 : index
    %c0_6 = arith.constant 0 : index
    %8 = vector.load %arg3[%c0_5, %c0_6] : memref<32x1xf32, #tpu.memory_space<vmem>>, vector<32x1xf32>
    %9 = vector.extract_strided_slice %3 {offsets = [0, 0], sizes = [8, 1], strides = [1, 1]} : vector<32x1xf32> to vector<8x1xf32>
    %10 = vector.shape_cast %9 : vector<8x1xf32> to vector<1x8x1xf32>
    %cst_7 = arith.constant dense<0.000000e+00> : vector<1xf32>
    %11 = vector.multi_reduction <add>, %10, %cst_7 [1, 2] : vector<1x8x1xf32> to vector<1xf32>
    %12 = vector.shape_cast %11 : vector<1xf32> to vector<1x1x1xf32>
    %13 = vector.extract %12[0, 0, 0] : f32 from vector<1x1x1xf32>
    %cst_8 = arith.constant 5.120000e+02 : f32
    %14 = arith.divf %13, %cst_8 : f32
    %15 = vector.extract_strided_slice %6 {offsets = [0, 0], sizes = [8, 1], strides = [1, 1]} : vector<32x1xf32> to vector<8x1xf32>
    %16 = vector.shape_cast %15 : vector<8x1xf32> to vector<1x8x1xf32>
    %cst_9 = arith.constant dense<0.000000e+00> : vector<1xf32>
    %17 = vector.multi_reduction <add>, %16, %cst_9 [1, 2] : vector<1x8x1xf32> to vector<1xf32>
    %18 = vector.shape_cast %17 : vector<1xf32> to vector<1x1x1xf32>
    %19 = vector.extract %18[0, 0, 0] : f32 from vector<1x1x1xf32>
    %cst_10 = arith.constant 5.120000e+02 : f32
    %20 = arith.divf %19, %cst_10 : f32
    %21 = arith.mulf %14, %14 : f32
    %22 = arith.subf %20, %21 : f32
    %cst_11 = arith.constant 9.99999974E-6 : f32
    %23 = arith.addf %22, %cst_11 : f32
    %24 = math.rsqrt %23 : f32
    %25 = vector.extract_strided_slice %7 {offsets = [0, 0], sizes = [8, 1], strides = [1, 1]} : vector<32x1xf32> to vector<8x1xf32>
    %26 = vector.broadcast %24 : f32 to vector<8x1xf32>
    %27 = arith.mulf %25, %26 : vector<8x1xf32>
    %28 = vector.extract_strided_slice %8 {offsets = [0, 0], sizes = [8, 1], strides = [1, 1]} : vector<32x1xf32> to vector<8x1xf32>
    %29 = arith.mulf %14, %24 : f32
    %30 = vector.broadcast %29 : f32 to vector<8x1xf32>
    %31 = arith.mulf %25, %30 : vector<8x1xf32>
    %32 = arith.subf %28, %31 : vector<8x1xf32>
    %33 = vector.extract_strided_slice %3 {offsets = [8, 0], sizes = [8, 1], strides = [1, 1]} : vector<32x1xf32> to vector<8x1xf32>
    %34 = vector.shape_cast %33 : vector<8x1xf32> to vector<1x8x1xf32>
    %cst_12 = arith.constant dense<0.000000e+00> : vector<1xf32>
    %35 = vector.multi_reduction <add>, %34, %cst_12 [1, 2] : vector<1x8x1xf32> to vector<1xf32>
    %36 = vector.shape_cast %35 : vector<1xf32> to vector<1x1x1xf32>
    %37 = vector.extract %36[0, 0, 0] : f32 from vector<1x1x1xf32>
    %cst_13 = arith.constant 5.120000e+02 : f32
    %38 = arith.divf %37, %cst_13 : f32
    %39 = vector.extract_strided_slice %6 {offsets = [8, 0], sizes = [8, 1], strides = [1, 1]} : vector<32x1xf32> to vector<8x1xf32>
    %40 = vector.shape_cast %39 : vector<8x1xf32> to vector<1x8x1xf32>
    %cst_14 = arith.constant dense<0.000000e+00> : vector<1xf32>
    %41 = vector.multi_reduction <add>, %40, %cst_14 [1, 2] : vector<1x8x1xf32> to vector<1xf32>
    %42 = vector.shape_cast %41 : vector<1xf32> to vector<1x1x1xf32>
    %43 = vector.extract %42[0, 0, 0] : f32 from vector<1x1x1xf32>
    %cst_15 = arith.constant 5.120000e+02 : f32
    %44 = arith.divf %43, %cst_15 : f32
    %45 = arith.mulf %38, %38 : f32
    %46 = arith.subf %44, %45 : f32
    %cst_16 = arith.constant 9.99999974E-6 : f32
    %47 = arith.addf %46, %cst_16 : f32
    %48 = math.rsqrt %47 : f32
    %49 = vector.extract_strided_slice %7 {offsets = [8, 0], sizes = [8, 1], strides = [1, 1]} : vector<32x1xf32> to vector<8x1xf32>
    %50 = vector.broadcast %48 : f32 to vector<8x1xf32>
    %51 = arith.mulf %49, %50 : vector<8x1xf32>
    %52 = vector.extract_strided_slice %8 {offsets = [8, 0], sizes = [8, 1], strides = [1, 1]} : vector<32x1xf32> to vector<8x1xf32>
    %53 = arith.mulf %38, %48 : f32
    %54 = vector.broadcast %53 : f32 to vector<8x1xf32>
    %55 = arith.mulf %49, %54 : vector<8x1xf32>
    %56 = arith.subf %52, %55 : vector<8x1xf32>
    %57 = vector.extract_strided_slice %3 {offsets = [16, 0], sizes = [8, 1], strides = [1, 1]} : vector<32x1xf32> to vector<8x1xf32>
    %58 = vector.shape_cast %57 : vector<8x1xf32> to vector<1x8x1xf32>
    %cst_17 = arith.constant dense<0.000000e+00> : vector<1xf32>
    %59 = vector.multi_reduction <add>, %58, %cst_17 [1, 2] : vector<1x8x1xf32> to vector<1xf32>
    %60 = vector.shape_cast %59 : vector<1xf32> to vector<1x1x1xf32>
    %61 = vector.extract %60[0, 0, 0] : f32 from vector<1x1x1xf32>
    %cst_18 = arith.constant 5.120000e+02 : f32
    %62 = arith.divf %61, %cst_18 : f32
    %63 = vector.extract_strided_slice %6 {offsets = [16, 0], sizes = [8, 1], strides = [1, 1]} : vector<32x1xf32> to vector<8x1xf32>
    %64 = vector.shape_cast %63 : vector<8x1xf32> to vector<1x8x1xf32>
    %cst_19 = arith.constant dense<0.000000e+00> : vector<1xf32>
    %65 = vector.multi_reduction <add>, %64, %cst_19 [1, 2] : vector<1x8x1xf32> to vector<1xf32>
    %66 = vector.shape_cast %65 : vector<1xf32> to vector<1x1x1xf32>
    %67 = vector.extract %66[0, 0, 0] : f32 from vector<1x1x1xf32>
    %cst_20 = arith.constant 5.120000e+02 : f32
    %68 = arith.divf %67, %cst_20 : f32
    %69 = arith.mulf %62, %62 : f32
    %70 = arith.subf %68, %69 : f32
    %cst_21 = arith.constant 9.99999974E-6 : f32
    %71 = arith.addf %70, %cst_21 : f32
    %72 = math.rsqrt %71 : f32
    %73 = vector.extract_strided_slice %7 {offsets = [16, 0], sizes = [8, 1], strides = [1, 1]} : vector<32x1xf32> to vector<8x1xf32>
    %74 = vector.broadcast %72 : f32 to vector<8x1xf32>
    %75 = arith.mulf %73, %74 : vector<8x1xf32>
    %76 = vector.extract_strided_slice %8 {offsets = [16, 0], sizes = [8, 1], strides = [1, 1]} : vector<32x1xf32> to vector<8x1xf32>
    %77 = arith.mulf %62, %72 : f32
    %78 = vector.broadcast %77 : f32 to vector<8x1xf32>
    %79 = arith.mulf %73, %78 : vector<8x1xf32>
    %80 = arith.subf %76, %79 : vector<8x1xf32>
    %81 = vector.extract_strided_slice %3 {offsets = [24, 0], sizes = [8, 1], strides = [1, 1]} : vector<32x1xf32> to vector<8x1xf32>
    %82 = vector.shape_cast %81 : vector<8x1xf32> to vector<1x8x1xf32>
    %cst_22 = arith.constant dense<0.000000e+00> : vector<1xf32>
    %83 = vector.multi_reduction <add>, %82, %cst_22 [1, 2] : vector<1x8x1xf32> to vector<1xf32>
    %84 = vector.shape_cast %83 : vector<1xf32> to vector<1x1x1xf32>
    %85 = vector.extract %84[0, 0, 0] : f32 from vector<1x1x1xf32>
    %cst_23 = arith.constant 5.120000e+02 : f32
    %86 = arith.divf %85, %cst_23 : f32
    %87 = vector.extract_strided_slice %6 {offsets = [24, 0], sizes = [8, 1], strides = [1, 1]} : vector<32x1xf32> to vector<8x1xf32>
    %88 = vector.shape_cast %87 : vector<8x1xf32> to vector<1x8x1xf32>
    %cst_24 = arith.constant dense<0.000000e+00> : vector<1xf32>
    %89 = vector.multi_reduction <add>, %88, %cst_24 [1, 2] : vector<1x8x1xf32> to vector<1xf32>
    %90 = vector.shape_cast %89 : vector<1xf32> to vector<1x1x1xf32>
    %91 = vector.extract %90[0, 0, 0] : f32 from vector<1x1x1xf32>
    %cst_25 = arith.constant 5.120000e+02 : f32
    %92 = arith.divf %91, %cst_25 : f32
    %93 = arith.mulf %86, %86 : f32
    %94 = arith.subf %92, %93 : f32
    %cst_26 = arith.constant 9.99999974E-6 : f32
    %95 = arith.addf %94, %cst_26 : f32
    %96 = math.rsqrt %95 : f32
    %97 = vector.extract_strided_slice %7 {offsets = [24, 0], sizes = [8, 1], strides = [1, 1]} : vector<32x1xf32> to vector<8x1xf32>
    %98 = vector.broadcast %96 : f32 to vector<8x1xf32>
    %99 = arith.mulf %97, %98 : vector<8x1xf32>
    %100 = vector.extract_strided_slice %8 {offsets = [24, 0], sizes = [8, 1], strides = [1, 1]} : vector<32x1xf32> to vector<8x1xf32>
    %101 = arith.mulf %86, %96 : f32
    %102 = vector.broadcast %101 : f32 to vector<8x1xf32>
    %103 = arith.mulf %97, %102 : vector<8x1xf32>
    %104 = arith.subf %100, %103 : vector<8x1xf32>
    %105 = tpu.concatenate %27, %51, %75, %99 in 0 : vector<8x1xf32>, vector<8x1xf32>, vector<8x1xf32>, vector<8x1xf32> -> vector<32x1xf32>
    %106 = tpu.concatenate %32, %56, %80, %104 in 0 : vector<8x1xf32>, vector<8x1xf32>, vector<8x1xf32>, vector<8x1xf32> -> vector<32x1xf32>
    %107 = vector.broadcast %105 : vector<32x1xf32> to vector<32x128xf32>
    %108 = arith.mulf %1, %107 : vector<32x128xf32>
    %109 = vector.broadcast %106 : vector<32x1xf32> to vector<32x128xf32>
    %110 = arith.addf %108, %109 : vector<32x128xf32>
    %c0_27 = arith.constant 0 : index
    %c0_28 = arith.constant 0 : index
    %111 = vector.load %arg4[%c0_27, %c0_28] : memref<96x32xbf16, #tpu.memory_space<vmem>>, vector<96x32xbf16>
    %112 = arith.truncf %110 : vector<32x128xf32> to vector<32x128xbf16>
    %cst_29 = arith.constant dense<0.000000e+00> : vector<96x128xf32>
    %113 = tpu.matmul %111, %112, %cst_29 {dimension_numbers = #tpu.dot_dimension_numbers<[1], [0], [0], [1], [0, 0, 1, 1], [], []>} : vector<96x32xbf16>, vector<32x128xbf16>, vector<96x128xf32> -> vector<96x128xf32>
    %114 = vector.extract_strided_slice %113 {offsets = [0, 0], sizes = [32, 128], strides = [1, 1]} : vector<96x128xf32> to vector<32x128xf32>
    %115 = vector.shape_cast %114 : vector<32x128xf32> to vector<4x8x128xf32>
    %116 = vector.extract_strided_slice %113 {offsets = [32, 0], sizes = [32, 128], strides = [1, 1]} : vector<96x128xf32> to vector<32x128xf32>
    %117 = vector.shape_cast %116 : vector<32x128xf32> to vector<4x8x128xf32>
    %118 = vector.extract_strided_slice %113 {offsets = [64, 0], sizes = [32, 128], strides = [1, 1]} : vector<96x128xf32> to vector<32x128xf32>
    %119 = vector.shape_cast %118 : vector<32x128xf32> to vector<4x8x128xf32>
    %120 = tpu.iota {dimensions = array<i32: 2>} : vector<4x8x128xi32>
    %c64_i32 = arith.constant 64 : i32
    %121 = vector.broadcast %c64_i32 : i32 to vector<4x8x128xi32>
    %122 = arith.cmpi slt, %120, %121 : vector<4x8x128xi32>
    %cst_30 = arith.constant -1.000000e+30 : f32
    %123 = vector.broadcast %cst_30 : f32 to vector<4x8x128xf32>
    %124 = arith.select %122, %117, %123 : vector<4x8x128xi1>, vector<4x8x128xf32>
    %cst_31 = arith.constant dense<0xFF800000> : vector<4x8xf32>
    %125 = vector.multi_reduction <maximumf>, %124, %cst_31 [2] : vector<4x8x128xf32> to vector<4x8xf32>
    %126 = vector.shape_cast %125 : vector<4x8xf32> to vector<4x8x1xf32>
    %127 = vector.broadcast %126 : vector<4x8x1xf32> to vector<4x8x128xf32>
    %128 = arith.subf %124, %127 : vector<4x8x128xf32>
    %129 = math.exp %128 : vector<4x8x128xf32>
    %cst_32 = arith.constant dense<0.000000e+00> : vector<4x8xf32>
    %130 = vector.multi_reduction <add>, %129, %cst_32 [2] : vector<4x8x128xf32> to vector<4x8xf32>
    %131 = vector.shape_cast %130 : vector<4x8xf32> to vector<4x8x1xf32>
    %132 = tpu.reciprocal %131 {approx = true} : vector<4x8x1xf32> -> vector<4x8x1xf32>
    %133 = vector.broadcast %132 : vector<4x8x1xf32> to vector<4x8x128xf32>
    %134 = arith.mulf %115, %133 : vector<4x8x128xf32>
    %135 = arith.truncf %119 : vector<4x8x128xf32> to vector<4x8x128xbf16>
    %136 = arith.truncf %129 : vector<4x8x128xf32> to vector<4x8x128xbf16>
    "tpu.trace_start"() <{level = 10 : i32, message = "hen,hdn->hed"}> : () -> ()
    %cst_33 = arith.constant dense<0.000000e+00> : vector<4x8x8xf32>
    %137 = tpu.matmul %135, %136, %cst_33 {dimension_numbers = #tpu.dot_dimension_numbers<[2], [2], [1], [1], [0, 0, 0, 1, 1, 1], [0], [0]>} : vector<4x8x128xbf16>, vector<4x8x128xbf16>, vector<4x8x8xf32> -> vector<4x8x8xf32>
    "tpu.trace_stop"() : () -> ()
    %138 = arith.truncf %137 : vector<4x8x8xf32> to vector<4x8x8xbf16>
    %139 = arith.truncf %134 : vector<4x8x128xf32> to vector<4x8x128xbf16>
    "tpu.trace_start"() <{level = 10 : i32, message = "hed,hdn->hen"}> : () -> ()
    %cst_34 = arith.constant dense<0.000000e+00> : vector<4x8x128xf32>
    %140 = tpu.matmul %138, %139, %cst_34 {dimension_numbers = #tpu.dot_dimension_numbers<[2], [1], [1], [2], [0, 0, 0, 1, 1, 2], [0], [0]>} : vector<4x8x8xbf16>, vector<4x8x128xbf16>, vector<4x8x128xf32> -> vector<4x8x128xf32>
    "tpu.trace_stop"() : () -> ()
    %141 = vector.shape_cast %140 : vector<4x8x128xf32> to vector<32x128xf32>
    %c0_35 = arith.constant 0 : index
    %c0_36 = arith.constant 0 : index
    %142 = vector.load %arg5[%c0_35, %c0_36] : memref<32x32xbf16, #tpu.memory_space<vmem>>, vector<32x32xbf16>
    %143 = arith.truncf %141 : vector<32x128xf32> to vector<32x128xbf16>
    %cst_37 = arith.constant dense<0.000000e+00> : vector<32x128xf32>
    %144 = tpu.matmul %142, %143, %cst_37 {dimension_numbers = #tpu.dot_dimension_numbers<[1], [0], [0], [1], [0, 0, 1, 1], [], []>} : vector<32x32xbf16>, vector<32x128xbf16>, vector<32x128xf32> -> vector<32x128xf32>
    %c0_38 = arith.constant 0 : index
    %c0_39 = arith.constant 0 : index
    %145 = vector.load %arg6[%c0_38, %c0_39] : memref<32x1xf32, #tpu.memory_space<vmem>>, vector<32x1xf32>
    %146 = vector.broadcast %145 : vector<32x1xf32> to vector<32x128xf32>
    %147 = arith.addf %144, %146 : vector<32x128xf32>
    %c0_40 = arith.constant 0 : index
    %c0_41 = arith.constant 0 : index
    %c0_42 = arith.constant 0 : index
    %148 = vector.load %arg7[%c0_40, %c0_41, %c0_42] : memref<1x32x128xf32, #tpu.memory_space<vmem>>, vector<1x32x128xf32>
    %149 = vector.shape_cast %148 : vector<1x32x128xf32> to vector<32x128xf32>
    %150 = vector.shape_cast %147 : vector<32x128xf32> to vector<1x32x128xf32>
    tpu.vector_store %arg7[%c0_40, %c0_41, %c0_42], %150 {strides = array<i32>} : memref<1x32x128xf32, #tpu.memory_space<vmem>>, vector<1x32x128xf32>,
    return
  }
  func.func @transform_0(%arg0: i32) -> (i32, i32, i32) {
    %c0_i32 = arith.constant 0 : i32
    %c0_i32_0 = arith.constant 0 : i32
    %c0_i32_1 = arith.constant 0 : i32
    return %arg0, %c0_i32, %c0_i32_0 : i32, i32, i32
  }
  func.func @transform_1(%arg0: i32) -> (i32, i32) {
    %c0_i32 = arith.constant 0 : i32
    %c0_i32_0 = arith.constant 0 : i32
    %c0_i32_1 = arith.constant 0 : i32
    return %c0_i32, %c0_i32_0 : i32, i32
  }
  func.func @transform_2(%arg0: i32) -> (i32, i32) {
    %c0_i32 = arith.constant 0 : i32
    %c0_i32_0 = arith.constant 0 : i32
    %c0_i32_1 = arith.constant 0 : i32
    return %c0_i32, %c0_i32_0 : i32, i32
  }
  func.func @transform_3(%arg0: i32) -> (i32, i32) {
    %c0_i32 = arith.constant 0 : i32
    %c0_i32_0 = arith.constant 0 : i32
    %c0_i32_1 = arith.constant 0 : i32
    return %c0_i32, %c0_i32_0 : i32, i32
  }
  func.func @transform_4(%arg0: i32) -> (i32, i32) {
    %c0_i32 = arith.constant 0 : i32
    %c0_i32_0 = arith.constant 0 : i32
    %c0_i32_1 = arith.constant 0 : i32
    return %c0_i32, %c0_i32_0 : i32, i32
  }
  func.func @transform_5(%arg0: i32) -> (i32, i32) {
    %c0_i32 = arith.constant 0 : i32
    %c0_i32_0 = arith.constant 0 : i32
    %c0_i32_1 = arith.constant 0 : i32
    return %c0_i32, %c0_i32_0 : i32, i32
  }
  func.func @transform_6(%arg0: i32) -> (i32, i32, i32) {
    %c0_i32 = arith.constant 0 : i32
    %c0_i32_0 = arith.constant 0 : i32
    %c0_i32_1 = arith.constant 0 : i32
    return %arg0, %c0_i32, %c0_i32_0 : i32, i32, i32
  }
}

</mosaic_0001>

<llo_original>
// kernel: tpu_custom_call.1
$region0: #{tpu_custom_call.1}
  #allocation0 [shape = 'u32[]', space=smem, size = 0x4, offset = 0x4, fixed_abs, tag = 'smem constant byte address 0x4 - core index']
  #allocation1 [shape = 'u32[144,128]{1,0:T(1,128)}', space=vmem, size = 0x12000, scoped, tag = 'internal scratch']
  %s0 = inlined_call_operand.vmem [shape: f32[2,32,128], index: 0, kind: input, shape index: {}]
  %s1 = inlined_call_operand.vmem [shape: f32[32,1], index: 1, kind: input, shape index: {}]
  %s2 = inlined_call_operand.vmem [shape: f32[32,1], index: 2, kind: input, shape index: {}]
  %s3 = inlined_call_operand.vmem [shape: bf16[96,32], index: 3, kind: input, shape index: {}]
  %s4 = inlined_call_operand.vmem [shape: bf16[32,32], index: 4, kind: input, shape index: {}]
  %s5 = inlined_call_operand.vmem [shape: f32[32,1], index: 5, kind: input, shape index: {}]
  %s6 = inlined_call_operand.hbm [shape: f32[2,32,128], index: 6, kind: output, shape index: {}]
  %s7 = sld [smem:[#allocation0]]
  $region57: #{tpu_custom_call.1} parent=0
    _
  %s9 = ssub.s32 1, %s7
  %s10 = scalar_select 0, %s9, %s7
  $region1: #{tpu_custom_call.1} parent=0
    #allocation2 [shape = 'u8[32768]{0}', space=vmem, size = 0x8000, scoped, tag = 'output window, operand 0']
    #allocation3 [shape = 's32[2]{0}', space=sflag, size = 0x8, scoped, tag = 'scoped memory for tpu_custom_call.1']
    %11 = vsyncpa [#allocation3], 0
    %s12 = scalar_lea.sflag [#allocation3], 1
    %13 = vsyncpa %s12, 0
    loop: start=0, step=1, limit=4
    $region2: #{tpu_custom_call.1} parent=1 // loop_pre_header
      _
    $region3: #{tpu_custom_call.1} parent=1 // loop_header
      %s15 = sphi 0, %s19
      %p16 = scmp.ge.s32.totalorder %s15, 4
      %s25 = sphi 0, %s27
      %s28 = sphi 0, %s25
      %s29 = sphi 0, %s28
      %s45 = sphi 0, %s29
      %s49 = sphi 0, %s49
      %s51 = sphi 0, %s49
      %s52 = sphi 0, %s51
      %s66 = sphi 0, %s52
      %s70 = sphi 0, %s70
      %s72 = sphi 0, %s70
      %s73 = sphi 0, %s72
      %s87 = sphi 0, %s73
      %s91 = sphi 0, %s91
      %s93 = sphi 0, %s91
      %s94 = sphi 0, %s93
      %s108 = sphi 0, %s94
      %s112 = sphi 0, %s112
      %s114 = sphi 0, %s112
      %s115 = sphi 0, %s114
      %s129 = sphi 0, %s115
      %s133 = sphi 0, %s133
      %s135 = sphi 0, %s133
      %s136 = sphi 0, %s135
      %s150 = sphi 0, %s136
      %s156 = sphi 0, %s158
      %s159 = sphi 0, %s156
      %s160 = sphi 0, %s159
      %s176 = sphi 0, %s160
    $region4: #{tpu_custom_call.1} parent=1 // loop_header_branch
      %18 = sbr.rel (%p16) target = $region8
    $region5: #{tpu_custom_call.1} parent=1 // loop_body
      %s20 = ssub.s32 %s15, 1
      %s21 = ssub.s32 %s15, 2
      %s22 = sadd.s32 %s15, 1
      %s23 = ssub.s32 %s15, %s22
      %p24 = scmp.eq.s32.totalorder %s23, 0
      %s26 = sadd.s32 %s25, 1
      %s27 = scalar_select %p24, %s25, %s26
      %p30 = pneg %p24
      %p31 = scmp.eq.s32.totalorder %s15, 1
      %p32 = por %p30, %p31
      %p33 = scmp.ne.s32.totalorder %s25, %s28
      %p34 = scmp.eq.s32.totalorder %s15, 0
      %p35 = por %p33, %p34
      %p36 = scmp.ne.s32.totalorder %s25, %s28
      %p37 = scmp.eq.s32.totalorder %s20, 1
      %p38 = por %p36, %p37
      %p39 = scmp.ne.s32.totalorder %s28, %s29
      %p40 = scmp.eq.s32.totalorder %s20, 0
      %p41 = por %p39, %p40
      %p42 = scmp.ne.s32.totalorder %s28, %s29
      %p43 = scmp.eq.s32.totalorder %s21, 1
      %p44 = por %p42, %p43
      %p46 = scmp.ne.s32.totalorder %s29, %s45
      %p47 = scmp.eq.s32.totalorder %s21, 0
      %p48 = por %p46, %p47
      %s50 = sadd.s32 %s49, 1
      %p53 = scmp.eq.s32.totalorder %s15, 1
      %p54 = scmp.ne.s32.totalorder %s49, %s51
      %p55 = scmp.eq.s32.totalorder %s15, 0
      %p56 = por %p54, %p55
      %p57 = scmp.ne.s32.totalorder %s49, %s51
      %p58 = scmp.eq.s32.totalorder %s20, 1
      %p59 = por %p57, %p58
      %p60 = scmp.ne.s32.totalorder %s51, %s52
      %p61 = scmp.eq.s32.totalorder %s20, 0
      %p62 = por %p60, %p61
      %p63 = scmp.ne.s32.totalorder %s51, %s52
      %p64 = scmp.eq.s32.totalorder %s21, 1
      %p65 = por %p63, %p64
      %p67 = scmp.ne.s32.totalorder %s52, %s66
      %p68 = scmp.eq.s32.totalorder %s21, 0
      %p69 = por %p67, %p68
      %s71 = sadd.s32 %s70, 1
      %p74 = scmp.eq.s32.totalorder %s15, 1
      %p75 = scmp.ne.s32.totalorder %s70, %s72
      %p76 = scmp.eq.s32.totalorder %s15, 0
      %p77 = por %p75, %p76
      %p78 = scmp.ne.s32.totalorder %s70, %s72
      %p79 = scmp.eq.s32.totalorder %s20, 1
      %p80 = por %p78, %p79
      %p81 = scmp.ne.s32.totalorder %s72, %s73
      %p82 = scmp.eq.s32.totalorder %s20, 0
      %p83 = por %p81, %p82
      %p84 = scmp.ne.s32.totalorder %s72, %s73
      %p85 = scmp.eq.s32.totalorder %s21, 1
      %p86 = por %p84, %p85
      %p88 = scmp.ne.s32.totalorder %s73, %s87
      %p89 = scmp.eq.s32.totalorder %s21, 0
      %p90 = por %p88, %p89
      %s92 = sadd.s32 %s91, 1
      %p95 = scmp.eq.s32.totalorder %s15, 1
      %p96 = scmp.ne.s32.totalorder %s91, %s93
      %p97 = scmp.eq.s32.totalorder %s15, 0
      %p98 = por %p96, %p97
      %p99 = scmp.ne.s32.totalorder %s91, %s93
      %p100 = scmp.eq.s32.totalorder %s20, 1
      %p101 = por %p99, %p100
      %p102 = scmp.ne.s32.totalorder %s93, %s94
      %p103 = scmp.eq.s32.totalorder %s20, 0
      %p104 = por %p102, %p103
      %p105 = scmp.ne.s32.totalorder %s93, %s94
      %p106 = scmp.eq.s32.totalorder %s21, 1
      %p107 = por %p105, %p106
      %p109 = scmp.ne.s32.totalorder %s94, %s108
      %p110 = scmp.eq.s32.totalorder %s21, 0
      %p111 = por %p109, %p110
      %s113 = sadd.s32 %s112, 1
      %p116 = scmp.eq.s32.totalorder %s15, 1
      %p117 = scmp.ne.s32.totalorder %s112, %s114
      %p118 = scmp.eq.s32.totalorder %s15, 0
      %p119 = por %p117, %p118
      %p120 = scmp.ne.s32.totalorder %s112, %s114
      %p121 = scmp.eq.s32.totalorder %s20, 1
      %p122 = por %p120, %p121
      %p123 = scmp.ne.s32.totalorder %s114, %s115
      %p124 = scmp.eq.s32.totalorder %s20, 0
      %p125 = por %p123, %p124
      %p126 = scmp.ne.s32.totalorder %s114, %s115
      %p127 = scmp.eq.s32.totalorder %s21, 1
      %p128 = por %p126, %p127
      %p130 = scmp.ne.s32.totalorder %s115, %s129
      %p131 = scmp.eq.s32.totalorder %s21, 0
      %p132 = por %p130, %p131
      %s134 = sadd.s32 %s133, 1
      %p137 = scmp.eq.s32.totalorder %s15, 1
      %p138 = scmp.ne.s32.totalorder %s133, %s135
      %p139 = scmp.eq.s32.totalorder %s15, 0
      %p140 = por %p138, %p139
      %p141 = scmp.ne.s32.totalorder %s133, %s135
      %p142 = scmp.eq.s32.totalorder %s20, 1
      %p143 = por %p141, %p142
      %p144 = scmp.ne.s32.totalorder %s135, %s136
      %p145 = scmp.eq.s32.totalorder %s20, 0
      %p146 = por %p144, %p145
      %p147 = scmp.ne.s32.totalorder %s135, %s136
      %p148 = scmp.eq.s32.totalorder %s21, 1
      %p149 = por %p147, %p148
      %p151 = scmp.ne.s32.totalorder %s136, %s150
      %p152 = scmp.eq.s32.totalorder %s21, 0
      %p153 = por %p151, %p152
      %s154 = ssub.s32 %s15, %s22
      %p155 = scmp.eq.s32.totalorder %s154, 0
      %s157 = sadd.s32 %s156, 1
      %s158 = scalar_select %p155, %s156, %s157
      %p161 = pneg %p155
      %p162 = scmp.eq.s32.totalorder %s15, 1
      %p163 = por %p161, %p162
      %p164 = scmp.ne.s32.totalorder %s156, %s159
      %p165 = scmp.eq.s32.totalorder %s15, 0
      %p166 = por %p164, %p165
      %p167 = scmp.ne.s32.totalorder %s156, %s159
      %p168 = scmp.eq.s32.totalorder %s20, 1
      %p169 = por %p167, %p168
      %p170 = scmp.ne.s32.totalorder %s159, %s160
      %p171 = scmp.eq.s32.totalorder %s20, 0
      %p172 = por %p170, %p171
      %p173 = scmp.ne.s32.totalorder %s159, %s160
      %p174 = scmp.eq.s32.totalorder %s21, 1
      %p175 = por %p173, %p174
      %p177 = scmp.ne.s32.totalorder %s160, %s176
      %p178 = scmp.eq.s32.totalorder %s21, 0
      %p179 = por %p177, %p178
      %p180 = scmp.le.s32.totalorder 1, %s15
      %p181 = scmp.lt.s32.totalorder %s15, 3
      %p182 = pnand %p180, %p181
      %p183 = pneg %p182
      // Predicated region
      $region9: #{tpu_custom_call.1} parent=5 // pred_check
        _
      $region10: #{tpu_custom_call.1} parent=5 // pred_check_branch
        %185 = sbr.rel (%p182) target = $region12
      $region11: #{tpu_custom_call.1} parent=5 // pred_region
        %s186 = ssub.s32 %s15, 1
        // Predicated region
        $region13: #{tpu_custom_call.1} parent=11 // pred_check
          %p187 = pneg %p62
        $region14: #{tpu_custom_call.1} parent=11 // pred_check_branch
          %189 = sbr.rel (%p187) target = $region16
        $region15: #{tpu_custom_call.1} parent=11 // pred_region
          _
        $region16: #{tpu_custom_call.1} parent=11 // pred_fallthru
          _
        // Predicated region
        $region17: #{tpu_custom_call.1} parent=11 // pred_check
          %p190 = pneg %p83
        $region18: #{tpu_custom_call.1} parent=11 // pred_check_branch
          %192 = sbr.rel (%p190) target = $region20
        $region19: #{tpu_custom_call.1} parent=11 // pred_region
          _
        $region20: #{tpu_custom_call.1} parent=11 // pred_fallthru
          _
        // Predicated region
        $region21: #{tpu_custom_call.1} parent=11 // pred_check
          %p193 = pneg %p104
        $region22: #{tpu_custom_call.1} parent=11 // pred_check_branch
          %195 = sbr.rel (%p193) target = $region24
        $region23: #{tpu_custom_call.1} parent=11 // pred_region
          _
        $region24: #{tpu_custom_call.1} parent=11 // pred_fallthru
          _
        // Predicated region
        $region25: #{tpu_custom_call.1} parent=11 // pred_check
          %p196 = pneg %p125
        $region26: #{tpu_custom_call.1} parent=11 // pred_check_branch
          %198 = sbr.rel (%p196) target = $region28
        $region27: #{tpu_custom_call.1} parent=11 // pred_region
          _
        $region28: #{tpu_custom_call.1} parent=11 // pred_fallthru
          _
        // Predicated region
        $region29: #{tpu_custom_call.1} parent=11 // pred_check
          %p199 = pneg %p146
        $region30: #{tpu_custom_call.1} parent=11 // pred_check_branch
          %201 = sbr.rel (%p199) target = $region32
        $region31: #{tpu_custom_call.1} parent=11 // pred_region
          _
        $region32: #{tpu_custom_call.1} parent=11 // pred_fallthru
          _
      $region12: #{tpu_custom_call.1} parent=5 // pred_fallthru
        _
      %p202 = scmp.lt.s32.totalorder %s15, 2
      // Predicated region
      $region33: #{tpu_custom_call.1} parent=5 // pred_check
        %p203 = pneg %p202
      $region34: #{tpu_custom_call.1} parent=5 // pred_check_branch
        %205 = sbr.rel (%p203) target = $region36
      $region35: #{tpu_custom_call.1} parent=5 // pred_region
        // Predicated region
        $region37: #{tpu_custom_call.1} parent=35 // pred_check
          %p206 = pneg %p35
        $region38: #{tpu_custom_call.1} parent=35 // pred_check_branch
          %208 = sbr.rel (%p206) target = $region40
        $region39: #{tpu_custom_call.1} parent=35 // pred_region
          %p209 = scmp.lt.s32.totalorder %s15, 1
          %s210 = scalar_select %p209, %s15, 1
          %s211 = smul.addr %s210, 4
          %s212 = smul.addr %s211, 8
          %s213 = scalar_lea.vmem %s0, %s212
        $region40: #{tpu_custom_call.1} parent=35 // pred_fallthru
          _
      $region36: #{tpu_custom_call.1} parent=5 // pred_fallthru
        _
      %p214 = scmp.le.s32.totalorder 1, %s15
      %p215 = scmp.lt.s32.totalorder %s15, 3
      %p216 = pnand %p214, %p215
      %p217 = pneg %p216
      // Predicated region
      $region41: #{tpu_custom_call.1} parent=5 // pred_check
        _
      $region42: #{tpu_custom_call.1} parent=5 // pred_check_branch
        %219 = sbr.rel (%p216) target = $region44
      $region43: #{tpu_custom_call.1} parent=5 // pred_region
        %s220 = ssub.s32 %s15, 1
        %p221 = scmp.lt.s32.totalorder %s20, 1
        %s222 = scalar_select %p221, %s20, 1
        %s223 = smul.addr %s222, 4
        %s224 = smul.addr %s223, 8
        %s225 = scalar_lea.vmem %s0, %s224
        %p226 = pneg %p41
        %p227 = pneg %p38
        %p228 = pneg %p62
        %p229 = pneg %p59
        %p230 = pneg %p83
        %p231 = pneg %p80
        %p232 = pneg %p104
        %p233 = pneg %p101
        %p234 = pneg %p125
        %p235 = pneg %p122
        %p236 = pneg %p146
        %p237 = pneg %p143
        %p238 = pneg %p172
        %p239 = pneg %p169
        %s240 = sand.u32 %s159, 1
        %s241 = scalar_lea.sflag [#allocation3], %s240
        %s242 = sand.u32 %s159, 1
        %s243 = smul.addr %s242, 32
        %s244 = scalar_lea.vmem [#allocation2], %s243
        %p245 = scmp.lt.s32.totalorder %s20, 1
        %s246 = scalar_select %p245, %s20, 1
        %s247 = smul.addr %s246, 4
        %s248 = smul.addr %s247, 8
        %s249 = scalar_lea.vmem %s0, %s248
        %v251 = vld [vmem:[%s249] sm:$0xff]
        %v252 = vld [vmem:[%s249 + $0x8] sm:$0xff]
        %v253 = vld [vmem:[%s249 + $0x10] sm:$0xff]
        %v254 = vld [vmem:[%s249 + $0x18] sm:$0xff]
        %255 = vadd.xlane.f32.xlu0 %v251
        %v256 = vpop.xlane.xlu0 %255
        %257 = vadd.xlane.f32.xlu0 %v252
        %v258 = vpop.xlane.xlu0 %257
        %259 = vadd.xlane.f32.xlu0 %v253
        %v260 = vpop.xlane.xlu0 %259
        %261 = vadd.xlane.f32.xlu0 %v254
        %v262 = vpop.xlane.xlu0 %261
        %v263 = vmul.f32 %v251, %v251
        %v264 = vmul.f32 %v252, %v252
        %v265 = vmul.f32 %v253, %v253
        %v266 = vmul.f32 %v254, %v254
        %267 = vadd.xlane.f32.xlu0 %v263
        %v268 = vpop.xlane.xlu0 %267
        %269 = vadd.xlane.f32.xlu0 %v264
        %v270 = vpop.xlane.xlu0 %269
        %271 = vadd.xlane.f32.xlu0 %v265
        %v272 = vpop.xlane.xlu0 %271
        %273 = vadd.xlane.f32.xlu0 %v266
        %v274 = vpop.xlane.xlu0 %273
        %v275 = vld [vmem:[%s1] sm:$0xff]
        %v276 = vld [vmem:[%s1 + $0x8] sm:$0xff]
        %v277 = vld [vmem:[%s1 + $0x10] sm:$0xff]
        %v278 = vld [vmem:[%s1 + $0x18] sm:$0xff]
        %v279 = vld [vmem:[%s2] sm:$0xff]
        %v280 = vld [vmem:[%s2 + $0x8] sm:$0xff]
        %v281 = vld [vmem:[%s2 + $0x10] sm:$0xff]
        %v282 = vld [vmem:[%s2 + $0x18] sm:$0xff]
        %vm283 = vcmask 7168
        %v284 = vsel %vm283, %v256, 0.0
        %285 = vadd.xlane.f32.xlu0 %v284
        %v286 = vpop.xlane.xlu0 %285
        %v287 = vrot.slane %v286, 4
        %v288 = vadd.f32 %v286, %v287
        %v289 = vrot.slane %v288, 2
        %v290 = vadd.f32 %v288, %v289
        %v291 = vrot.slane %v290, 1
        %v292 = vadd.f32 %v290, %v291
        %s293 = vtos %v292
        %v294 = vrcp.pop 512.0
        %s295 = vtos %v294
        %s296 = smul.f32 %s293, %s295
        %v297 = vsel %vm283, %v268, 0.0
        %298 = vadd.xlane.f32.xlu0 %v297
        %v299 = vpop.xlane.xlu0 %298
        %v300 = vrot.slane %v299, 4
        %v301 = vadd.f32 %v299, %v300
        %v302 = vrot.slane %v301, 2
        %v303 = vadd.f32 %v301, %v302
        %v304 = vrot.slane %v303, 1
        %v305 = vadd.f32 %v303, %v304
        %s306 = vtos %v305
        %v307 = vrcp.pop 512.0
        %s308 = vtos %v307
        %s309 = smul.f32 %s306, %s308
        %s310 = smul.f32 %s296, %s296
        %s311 = ssub.f32 %s309, %s310
        %s312 = sadd.f32 %s311, 1e-05
        %v313 = vstv %s312
        %v314 = vrsqrt.pop %v313
        %s315 = vtos %v314
        %v316 = vstv %s315
        %v317 = vmul.f32 %v275, %v316
        %s318 = smul.f32 %s296, %s315
        %v319 = vstv %s318
        %v320 = vmul.f32 %v275, %v319
        %v321 = vsub.f32 %v279, %v320
        %v322 = vsel %vm283, %v258, 0.0
        %323 = vadd.xlane.f32.xlu0 %v322
        %v324 = vpop.xlane.xlu0 %323
        %v325 = vrot.slane %v324, 4
        %v326 = vadd.f32 %v324, %v325
        %v327 = vrot.slane %v326, 2
        %v328 = vadd.f32 %v326, %v327
        %v329 = vrot.slane %v328, 1
        %v330 = vadd.f32 %v328, %v329
        %s331 = vtos %v330
        %v332 = vrcp.pop 512.0
        %s333 = vtos %v332
        %s334 = smul.f32 %s331, %s333
        %v335 = vsel %vm283, %v270, 0.0
        %336 = vadd.xlane.f32.xlu0 %v335
        %v337 = vpop.xlane.xlu0 %336
        %v338 = vrot.slane %v337, 4
        %v339 = vadd.f32 %v337, %v338
        %v340 = vrot.slane %v339, 2
        %v341 = vadd.f32 %v339, %v340
        %v342 = vrot.slane %v341, 1
        %v343 = vadd.f32 %v341, %v342
        %s344 = vtos %v343
        %v345 = vrcp.pop 512.0
        %s346 = vtos %v345
        %s347 = smul.f32 %s344, %s346
        %s348 = smul.f32 %s334, %s334
        %s349 = ssub.f32 %s347, %s348
        %s350 = sadd.f32 %s349, 1e-05
        %v351 = vstv %s350
        %v352 = vrsqrt.pop %v351
        %s353 = vtos %v352
        %v354 = vstv %s353
        %v355 = vmul.f32 %v276, %v354
        %s356 = smul.f32 %s334, %s353
        %v357 = vstv %s356
        %v358 = vmul.f32 %v276, %v357
        %v359 = vsub.f32 %v280, %v358
        %v360 = vsel %vm283, %v260, 0.0
        %361 = vadd.xlane.f32.xlu0 %v360
        %v362 = vpop.xlane.xlu0 %361
        %v363 = vrot.slane %v362, 4
        %v364 = vadd.f32 %v362, %v363
        %v365 = vrot.slane %v364, 2
        %v366 = vadd.f32 %v364, %v365
        %v367 = vrot.slane %v366, 1
        %v368 = vadd.f32 %v366, %v367
        %s369 = vtos %v368
        %v370 = vrcp.pop 512.0
        %s371 = vtos %v370
        %s372 = smul.f32 %s369, %s371
        %v373 = vsel %vm283, %v272, 0.0
        %374 = vadd.xlane.f32.xlu0 %v373
        %v375 = vpop.xlane.xlu0 %374
        %v376 = vrot.slane %v375, 4
        %v377 = vadd.f32 %v375, %v376
        %v378 = vrot.slane %v377, 2
        %v379 = vadd.f32 %v377, %v378
        %v380 = vrot.slane %v379, 1
        %v381 = vadd.f32 %v379, %v380
        %s382 = vtos %v381
        %v383 = vrcp.pop 512.0
        %s384 = vtos %v383
        %s385 = smul.f32 %s382, %s384
        %s386 = smul.f32 %s372, %s372
        %s387 = ssub.f32 %s385, %s386
        %s388 = sadd.f32 %s387, 1e-05
        %v389 = vstv %s388
        %v390 = vrsqrt.pop %v389
        %s391 = vtos %v390
        %v392 = vstv %s391
        %v393 = vmul.f32 %v277, %v392
        %s394 = smul.f32 %s372, %s391
        %v395 = vstv %s394
        %v396 = vmul.f32 %v277, %v395
        %v397 = vsub.f32 %v281, %v396
        %v398 = vsel %vm283, %v262, 0.0
        %399 = vadd.xlane.f32.xlu0 %v398
        %v400 = vpop.xlane.xlu0 %399
        %v401 = vrot.slane %v400, 4
        %v402 = vadd.f32 %v400, %v401
        %v403 = vrot.slane %v402, 2
        %v404 = vadd.f32 %v402, %v403
        %v405 = vrot.slane %v404, 1
        %v406 = vadd.f32 %v404, %v405
        %s407 = vtos %v406
        %v408 = vrcp.pop 512.0
        %s409 = vtos %v408
        %s410 = smul.f32 %s407, %s409
        %v411 = vsel %vm283, %v274, 0.0
        %412 = vadd.xlane.f32.xlu0 %v411
        %v413 = vpop.xlane.xlu0 %412
        %v414 = vrot.slane %v413, 4
        %v415 = vadd.f32 %v413, %v414
        %v416 = vrot.slane %v415, 2
        %v417 = vadd.f32 %v415, %v416
        %v418 = vrot.slane %v417, 1
        %v419 = vadd.f32 %v417, %v418
        %s420 = vtos %v419
        %v421 = vrcp.pop 512.0
        %s422 = vtos %v421
        %s423 = smul.f32 %s420, %s422
        %s424 = smul.f32 %s410, %s410
        %s425 = ssub.f32 %s423, %s424
        %s426 = sadd.f32 %s425, 1e-05
        %v427 = vstv %s426
        %v428 = vrsqrt.pop %v427
        %s429 = vtos %v428
        %v430 = vstv %s429
        %v431 = vmul.f32 %v278, %v430
        %s432 = smul.f32 %s410, %s429
        %v433 = vstv %s432
        %v434 = vmul.f32 %v278, %v433
        %v435 = vsub.f32 %v282, %v434
        %437 = vset.pattern.permute.xlu0 0
        %438 = vperm.xlu0 %437, %v317
        %v439 = vpop.permute.xlu0 %438
        %442 = vset.pattern.permute.xlu0 0
        %443 = vperm.xlu0 %442, %v355
        %v444 = vpop.permute.xlu0 %443
        %447 = vset.pattern.permute.xlu0 0
        %448 = vperm.xlu0 %447, %v393
        %v449 = vpop.permute.xlu0 %448
        %452 = vset.pattern.permute.xlu0 0
        %453 = vperm.xlu0 %452, %v431
        %v454 = vpop.permute.xlu0 %453
        %v456 = vmul.f32 %v251, %v439
        %v457 = vmul.f32 %v252, %v444
        %v458 = vmul.f32 %v253, %v449
        %v459 = vmul.f32 %v254, %v454
        %461 = vset.pattern.permute.xlu0 0
        %462 = vperm.xlu0 %461, %v321
        %v463 = vpop.permute.xlu0 %462
        %466 = vset.pattern.permute.xlu0 0
        %467 = vperm.xlu0 %466, %v359
        %v468 = vpop.permute.xlu0 %467
        %471 = vset.pattern.permute.xlu0 0
        %472 = vperm.xlu0 %471, %v397
        %v473 = vpop.permute.xlu0 %472
        %476 = vset.pattern.permute.xlu0 0
        %477 = vperm.xlu0 %476, %v435
        %v478 = vpop.permute.xlu0 %477
        %v480 = vadd.f32 %v456, %v463
        %v481 = vadd.f32 %v457, %v468
        %v482 = vadd.f32 %v458, %v473
        %v483 = vadd.f32 %v459, %v478
        %v484 = vld [vmem:[%s3] sm:$0xf]
        %v485 = vld [vmem:[%s3 + $0x4] sm:$0xf]
        %v486 = vld [vmem:[%s3 + $0x8] sm:$0xf]
        %v487 = vld [vmem:[%s3 + $0xc] sm:$0xf]
        %v488 = vld [vmem:[%s3 + $0x10] sm:$0xf]
        %v489 = vld [vmem:[%s3 + $0x14] sm:$0xf]
        %v490 = vld [vmem:[%s3 + $0x18] sm:$0xf]
        %v491 = vld [vmem:[%s3 + $0x1c] sm:$0xf]
        %v492 = vld [vmem:[%s3 + $0x20] sm:$0xf]
        %v493 = vld [vmem:[%s3 + $0x24] sm:$0xf]
        %v494 = vld [vmem:[%s3 + $0x28] sm:$0xf]
        %v495 = vld [vmem:[%s3 + $0x2c] sm:$0xf]
        %v496 = vpack.c.bf16 %v481, %v480
        %v497 = vpack.c.bf16 %v483, %v482
        %v510 = vunpack.c.l.b16 %v484
        %v511 = vunpack.c.l.b16 %v485
        %v512 = vunpack.c.l.b16 %v486
        %v513 = vunpack.c.l.b16 %v487
        %v514 = vunpack.c.l.b16 %v488
        %v515 = vunpack.c.l.b16 %v489
        %v516 = vunpack.c.l.b16 %v490
        %v517 = vunpack.c.l.b16 %v491
        %v518 = vunpack.c.l.b16 %v492
        %v519 = vunpack.c.l.b16 %v493
        %v520 = vunpack.c.l.b16 %v494
        %v521 = vunpack.c.l.b16 %v495
        %v522 = vpack.c.b16 %v511, %v510
        %v523 = vpack.c.b16 %v513, %v512
        %v524 = vpack.c.b16 %v515, %v514
        %v525 = vpack.c.b16 %v517, %v516
        %v526 = vpack.c.b16 %v519, %v518
        %v527 = vpack.c.b16 %v521, %v520
        %vm528 = vcmask 261120
        %v530 = vsel %vm528, %v522, 0
        %v533 = vsel %vm528, %v523, 0
        %v536 = vsel %vm528, %v524, 0
        %v539 = vsel %vm528, %v525, 0
        %v542 = vsel %vm528, %v526, 0
        %v545 = vsel %vm528, %v527, 0
        %547 = vmatprep.subr.bf16.mxu0 0
        %548 = vmatpush1.bf16.msra.mxu0 0
        %549 = vmatprep.subr.bf16.mxu0 0
        %550 = vmatpush1.bf16.msra.mxu0 0
        %551 = vmatprep.subr.bf16.mxu0 0
        %552 = vmatpush1.bf16.msra.mxu0 0
        %553 = vmatprep.subr.bf16.mxu0 0
        %554 = vmatpush1.bf16.msra.mxu0 0
        %555 = vmatprep.subr.bf16.mxu0 0
        %556 = vmatpush1.bf16.msra.mxu0 0
        %557 = vmatprep.subr.bf16.mxu0 0
        %558 = vmatpush1.bf16.msra.mxu0 0
        %559 = vmatprep.subr.bf16.mxu0 0
        %560 = vmatpush1.bf16.msra.mxu0 %v497
        %561 = vmatprep.subr.bf16.mxu0 0
        %562 = vmatpush1.bf16.msra.mxu0 %v496
        %563 = vmatprep.subr.bf16.mxu0 0
        %564 = vmatpush2.bf16.msra.mxu0 0
        %565 = vmatprep.subr.bf16.mxu0 0
        %566 = vmatpush2.bf16.msra.mxu0 0
        %567 = vmatprep.subr.bf16.mxu0 0
        %568 = vmatpush2.bf16.msra.mxu0 0
        %569 = vmatprep.subr.bf16.mxu0 0
        %570 = vmatpush2.bf16.msra.mxu0 0
        %571 = vmatprep.subr.bf16.mxu0 0
        %572 = vmatpush2.bf16.msra.mxu0 0
        %573 = vmatprep.subr.bf16.mxu0 0
        %574 = vmatpush2.bf16.msra.mxu0 0
        %575 = vmatprep.subr.bf16.mxu0 0
        %576 = vmatpush2.bf16.msra.mxu0 0
        %577 = vmatprep.subr.bf16.mxu0 0
        %578 = vmatpush2.bf16.msra.mxu0 0
        %579 = vmatprep.mubr.bf16.mxu0 0
        %580 = vmatmul.mubr.bf16.gmra.mxu0 %v530
        %v581 = vpop.f32.mrf.mxu0
        %v582 = vadd.f32 0.0, %v581
        %v583 = vpop.f32.mrf.mxu0
        %v584 = vpop.f32.mrf.mxu0
        %v585 = vadd.f32 0.0, %v584
        %v586 = vpop.f32.mrf.mxu0
        %587 = vmatprep.mubr.bf16.mxu0 0
        %588 = vmatmul.mubr.bf16.gmra.mxu0 %v533
        %v589 = vpop.f32.mrf.mxu0
        %v590 = vadd.f32 0.0, %v589
        %v591 = vpop.f32.mrf.mxu0
        %v592 = vpop.f32.mrf.mxu0
        %v593 = vadd.f32 0.0, %v592
        %v594 = vpop.f32.mrf.mxu0
        %595 = vmatprep.mubr.bf16.mxu0 0
        %596 = vmatmul.mubr.bf16.gmra.mxu0 %v536
        %v597 = vpop.f32.mrf.mxu0
        %v598 = vadd.f32 0.0, %v597
        %v599 = vpop.f32.mrf.mxu0
        %v600 = vpop.f32.mrf.mxu0
        %v601 = vadd.f32 0.0, %v600
        %v602 = vpop.f32.mrf.mxu0
        %603 = vmatprep.mubr.bf16.mxu0 0
        %604 = vmatmul.mubr.bf16.gmra.mxu0 %v539
        %v605 = vpop.f32.mrf.mxu0
        %v606 = vadd.f32 0.0, %v605
        %v607 = vpop.f32.mrf.mxu0
        %v608 = vpop.f32.mrf.mxu0
        %v609 = vadd.f32 0.0, %v608
        %v610 = vpop.f32.mrf.mxu0
        %611 = vmatprep.mubr.bf16.mxu0 0
        %612 = vmatmul.mubr.bf16.gmra.mxu0 %v542
        %v613 = vpop.f32.mrf.mxu0
        %v614 = vadd.f32 0.0, %v613
        %v615 = vpop.f32.mrf.mxu0
        %v616 = vpop.f32.mrf.mxu0
        %v617 = vadd.f32 0.0, %v616
        %v618 = vpop.f32.mrf.mxu0
        %619 = vmatprep.mubr.bf16.mxu0 0
        %620 = vmatmul.mubr.bf16.gmra.mxu0 %v545
        %v621 = vpop.f32.mrf.mxu0
        %v622 = vadd.f32 0.0, %v621
        %v623 = vpop.f32.mrf.mxu0
        %v624 = vpop.f32.mrf.mxu0
        %v625 = vadd.f32 0.0, %v624
        %v626 = vpop.f32.mrf.mxu0
        %627 = vdwg.mxu0
        %v628 = vlaneseq
        %v629 = vand.u32 %v628, 127
        %vm630 = vcmp.lt.s32.totalorder %v629, 64
        %v631 = vsel %vm630, %v598, -1e+30
        %v632 = vsel %vm630, %v601, -1e+30
        %v633 = vsel %vm630, %v606, -1e+30
        %v634 = vsel %vm630, %v609, -1e+30
        %635 = vmax.xlane.f32.xlu0 %v631
        %v636 = vpop.xlane.xlu0 %635
        %637 = vmax.xlane.f32.xlu0 %v632
        %v638 = vpop.xlane.xlu0 %637
        %639 = vmax.xlane.f32.xlu0 %v633
        %v640 = vpop.xlane.xlu0 %639
        %641 = vmax.xlane.f32.xlu0 %v634
        %v642 = vpop.xlane.xlu0 %641
        %v643 = vsub.f32 %v631, %v636
        %v644 = vsub.f32 %v632, %v638
        %v645 = vsub.f32 %v633, %v640
        %v646 = vsub.f32 %v634, %v642
        %v647 = vmul.f32 %v643, 1.442695
        %v648 = vpow.pop %v647
        %v649 = vmul.f32 %v644, 1.442695
        %v650 = vpow.pop %v649
        %v651 = vmul.f32 %v645, 1.442695
        %v652 = vpow.pop %v651
        %v653 = vmul.f32 %v646, 1.442695
        %v654 = vpow.pop %v653
        %655 = vadd.xlane.f32.xlu0 %v648
        %v656 = vpop.xlane.xlu0 %655
        %657 = vadd.xlane.f32.xlu0 %v650
        %v658 = vpop.xlane.xlu0 %657
        %659 = vadd.xlane.f32.xlu0 %v652
        %v660 = vpop.xlane.xlu0 %659
        %661 = vadd.xlane.f32.xlu0 %v654
        %v662 = vpop.xlane.xlu0 %661
        %v663 = vrcp.pop %v656
        %v664 = vrcp.pop %v658
        %v665 = vrcp.pop %v660
        %v666 = vrcp.pop %v662
        %v667 = vmul.f32 %v582, %v663
        %v668 = vmul.f32 %v585, %v664
        %v669 = vmul.f32 %v590, %v665
        %v670 = vmul.f32 %v593, %v666
        %v671 = vpack.c.bf16 %v614, %v614
        %v672 = vpack.c.bf16 %v617, %v617
        %v673 = vpack.c.bf16 %v622, %v622
        %v674 = vpack.c.bf16 %v625, %v625
        %v675 = vpack.c.bf16 %v648, %v648
        %v676 = vpack.c.bf16 %v650, %v650
        %v677 = vpack.c.bf16 %v652, %v652
        %v678 = vpack.c.bf16 %v654, %v654
        %679 = vmatprep.subr.bf16.mxu0 0
        %680 = vmatpush1.bf16.xpose.msra.mxu0 0
        %681 = vmatprep.subr.bf16.mxu0 0
        %682 = vmatpush1.bf16.xpose.msra.mxu0 0
        %683 = vmatprep.subr.bf16.mxu0 0
        %684 = vmatpush1.bf16.xpose.msra.mxu0 0
        %685 = vmatprep.subr.bf16.mxu0 0
        %686 = vmatpush1.bf16.xpose.msra.mxu0 0
        %687 = vmatprep.subr.bf16.mxu0 0
        %688 = vmatpush1.bf16.xpose.msra.mxu0 0
        %689 = vmatprep.subr.bf16.mxu0 0
        %690 = vmatpush1.bf16.xpose.msra.mxu0 0
        %691 = vmatprep.subr.bf16.mxu0 0
        %692 = vmatpush1.bf16.xpose.msra.mxu0 0
        %693 = vmatprep.subr.bf16.mxu0 0
        %694 = vmatpush1.bf16.xpose.msra.mxu0 %v675
        %695 = vmatprep.subr.bf16.mxu0 0
        %696 = vmatpush2.bf16.xpose.msra.mxu0 0
        %697 = vmatprep.subr.bf16.mxu0 0
        %698 = vmatpush2.bf16.xpose.msra.mxu0 0
        %699 = vmatprep.subr.bf16.mxu0 0
        %700 = vmatpush2.bf16.xpose.msra.mxu0 0
        %701 = vmatprep.subr.bf16.mxu0 0
        %702 = vmatpush2.bf16.xpose.msra.mxu0 0
        %703 = vmatprep.subr.bf16.mxu0 0
        %704 = vmatpush2.bf16.xpose.msra.mxu0 0
        %705 = vmatprep.subr.bf16.mxu0 0
        %706 = vmatpush2.bf16.xpose.msra.mxu0 0
        %707 = vmatprep.subr.bf16.mxu0 0
        %708 = vmatpush2.bf16.xpose.msra.mxu0 0
        %709 = vmatprep.subr.bf16.mxu0 0
        %710 = vmatpush2.bf16.xpose.msra.mxu0 0
        %711 = vmatprep.mubr.bf16.mxu0 0
        %712 = vmatmul.mubr.bf16.gmra.mxu0 %v671
        %v713 = vpop.f32.mrf.mxu0
        %v714 = vadd.f32 0.0, %v713
        %v715 = vpop.f32.mrf.mxu0
        %v716 = vpop.f32.mrf.mxu0
        %v717 = vpop.f32.mrf.mxu0
        %718 = vdwg.mxu0
        %719 = vmatprep.subr.bf16.mxu0 0
        %720 = vmatpush1.bf16.xpose.msra.mxu0 0
        %721 = vmatprep.subr.bf16.mxu0 0
        %722 = vmatpush1.bf16.xpose.msra.mxu0 0
        %723 = vmatprep.subr.bf16.mxu0 0
        %724 = vmatpush1.bf16.xpose.msra.mxu0 0
        %725 = vmatprep.subr.bf16.mxu0 0
        %726 = vmatpush1.bf16.xpose.msra.mxu0 0
        %727 = vmatprep.subr.bf16.mxu0 0
        %728 = vmatpush1.bf16.xpose.msra.mxu0 0
        %729 = vmatprep.subr.bf16.mxu0 0
        %730 = vmatpush1.bf16.xpose.msra.mxu0 0
        %731 = vmatprep.subr.bf16.mxu0 0
        %732 = vmatpush1.bf16.xpose.msra.mxu0 0
        %733 = vmatprep.subr.bf16.mxu0 0
        %734 = vmatpush1.bf16.xpose.msra.mxu0 %v676
        %735 = vmatprep.subr.bf16.mxu0 0
        %736 = vmatpush2.bf16.xpose.msra.mxu0 0
        %737 = vmatprep.subr.bf16.mxu0 0
        %738 = vmatpush2.bf16.xpose.msra.mxu0 0
        %739 = vmatprep.subr.bf16.mxu0 0
        %740 = vmatpush2.bf16.xpose.msra.mxu0 0
        %741 = vmatprep.subr.bf16.mxu0 0
        %742 = vmatpush2.bf16.xpose.msra.mxu0 0
        %743 = vmatprep.subr.bf16.mxu0 0
        %744 = vmatpush2.bf16.xpose.msra.mxu0 0
        %745 = vmatprep.subr.bf16.mxu0 0
        %746 = vmatpush2.bf16.xpose.msra.mxu0 0
        %747 = vmatprep.subr.bf16.mxu0 0
        %748 = vmatpush2.bf16.xpose.msra.mxu0 0
        %749 = vmatprep.subr.bf16.mxu0 0
        %750 = vmatpush2.bf16.xpose.msra.mxu0 0
        %751 = vmatprep.mubr.bf16.mxu0 0
        %752 = vmatmul.mubr.bf16.gmra.mxu0 %v672
        %v753 = vpop.f32.mrf.mxu0
        %v754 = vadd.f32 0.0, %v753
        %v755 = vpop.f32.mrf.mxu0
        %v756 = vpop.f32.mrf.mxu0
        %v757 = vpop.f32.mrf.mxu0
        %758 = vdwg.mxu0
        %759 = vmatprep.subr.bf16.mxu0 0
        %760 = vmatpush1.bf16.xpose.msra.mxu0 0
        %761 = vmatprep.subr.bf16.mxu0 0
        %762 = vmatpush1.bf16.xpose.msra.mxu0 0
        %763 = vmatprep.subr.bf16.mxu0 0
        %764 = vmatpush1.bf16.xpose.msra.mxu0 0
        %765 = vmatprep.subr.bf16.mxu0 0
        %766 = vmatpush1.bf16.xpose.msra.mxu0 0
        %767 = vmatprep.subr.bf16.mxu0 0
        %768 = vmatpush1.bf16.xpose.msra.mxu0 0
        %769 = vmatprep.subr.bf16.mxu0 0
        %770 = vmatpush1.bf16.xpose.msra.mxu0 0
        %771 = vmatprep.subr.bf16.mxu0 0
        %772 = vmatpush1.bf16.xpose.msra.mxu0 0
        %773 = vmatprep.subr.bf16.mxu0 0
        %774 = vmatpush1.bf16.xpose.msra.mxu0 %v677
        %775 = vmatprep.subr.bf16.mxu0 0
        %776 = vmatpush2.bf16.xpose.msra.mxu0 0
        %777 = vmatprep.subr.bf16.mxu0 0
        %778 = vmatpush2.bf16.xpose.msra.mxu0 0
        %779 = vmatprep.subr.bf16.mxu0 0
        %780 = vmatpush2.bf16.xpose.msra.mxu0 0
        %781 = vmatprep.subr.bf16.mxu0 0
        %782 = vmatpush2.bf16.xpose.msra.mxu0 0
        %783 = vmatprep.subr.bf16.mxu0 0
        %784 = vmatpush2.bf16.xpose.msra.mxu0 0
        %785 = vmatprep.subr.bf16.mxu0 0
        %786 = vmatpush2.bf16.xpose.msra.mxu0 0
        %787 = vmatprep.subr.bf16.mxu0 0
        %788 = vmatpush2.bf16.xpose.msra.mxu0 0
        %789 = vmatprep.subr.bf16.mxu0 0
        %790 = vmatpush2.bf16.xpose.msra.mxu0 0
        %791 = vmatprep.mubr.bf16.mxu0 0
        %792 = vmatmul.mubr.bf16.gmra.mxu0 %v673
        %v793 = vpop.f32.mrf.mxu0
        %v794 = vadd.f32 0.0, %v793
        %v795 = vpop.f32.mrf.mxu0
        %v796 = vpop.f32.mrf.mxu0
        %v797 = vpop.f32.mrf.mxu0
        %798 = vdwg.mxu0
        %799 = vmatprep.subr.bf16.mxu0 0
        %800 = vmatpush1.bf16.xpose.msra.mxu0 0
        %801 = vmatprep.subr.bf16.mxu0 0
        %802 = vmatpush1.bf16.xpose.msra.mxu0 0
        %803 = vmatprep.subr.bf16.mxu0 0
        %804 = vmatpush1.bf16.xpose.msra.mxu0 0
        %805 = vmatprep.subr.bf16.mxu0 0
        %806 = vmatpush1.bf16.xpose.msra.mxu0 0
        %807 = vmatprep.subr.bf16.mxu0 0
        %808 = vmatpush1.bf16.xpose.msra.mxu0 0
        %809 = vmatprep.subr.bf16.mxu0 0
        %810 = vmatpush1.bf16.xpose.msra.mxu0 0
        %811 = vmatprep.subr.bf16.mxu0 0
        %812 = vmatpush1.bf16.xpose.msra.mxu0 0
        %813 = vmatprep.subr.bf16.mxu0 0
        %814 = vmatpush1.bf16.xpose.msra.mxu0 %v678
        %815 = vmatprep.subr.bf16.mxu0 0
        %816 = vmatpush2.bf16.xpose.msra.mxu0 0
        %817 = vmatprep.subr.bf16.mxu0 0
        %818 = vmatpush2.bf16.xpose.msra.mxu0 0
        %819 = vmatprep.subr.bf16.mxu0 0
        %820 = vmatpush2.bf16.xpose.msra.mxu0 0
        %821 = vmatprep.subr.bf16.mxu0 0
        %822 = vmatpush2.bf16.xpose.msra.mxu0 0
        %823 = vmatprep.subr.bf16.mxu0 0
        %824 = vmatpush2.bf16.xpose.msra.mxu0 0
        %825 = vmatprep.subr.bf16.mxu0 0
        %826 = vmatpush2.bf16.xpose.msra.mxu0 0
        %827 = vmatprep.subr.bf16.mxu0 0
        %828 = vmatpush2.bf16.xpose.msra.mxu0 0
        %829 = vmatprep.subr.bf16.mxu0 0
        %830 = vmatpush2.bf16.xpose.msra.mxu0 0
        %831 = vmatprep.mubr.bf16.mxu0 0
        %832 = vmatmul.mubr.bf16.gmra.mxu0 %v674
        %v833 = vpop.f32.mrf.mxu0
        %v834 = vadd.f32 0.0, %v833
        %v835 = vpop.f32.mrf.mxu0
        %v836 = vpop.f32.mrf.mxu0
        %v837 = vpop.f32.mrf.mxu0
        %838 = vdwg.mxu0
        %v839 = vpack.c.bf16 %v714, %v714
        %v840 = vpack.c.bf16 %v754, %v754
        %v841 = vpack.c.bf16 %v794, %v794
        %v842 = vpack.c.bf16 %v834, %v834
        %v843 = vpack.c.bf16 %v667, %v667
        %v844 = vpack.c.bf16 %v668, %v668
        %v845 = vpack.c.bf16 %v669, %v669
        %v846 = vpack.c.bf16 %v670, %v670
        %vm847 = vcmask 64512
        %v849 = vsel %vm847, %v839, 0
        %vm851 = vcmask 1043456
        %v853 = vsel %vm851, %v843, 0
        %855 = vmatprep.subr.bf16.mxu0 0
        %856 = vmatpush1.bf16.msra.mxu0 0
        %857 = vmatprep.subr.bf16.mxu0 0
        %858 = vmatpush1.bf16.msra.mxu0 0
        %859 = vmatprep.subr.bf16.mxu0 0
        %860 = vmatpush1.bf16.msra.mxu0 0
        %861 = vmatprep.subr.bf16.mxu0 0
        %862 = vmatpush1.bf16.msra.mxu0 0
        %863 = vmatprep.subr.bf16.mxu0 0
        %864 = vmatpush1.bf16.msra.mxu0 0
        %865 = vmatprep.subr.bf16.mxu0 0
        %866 = vmatpush1.bf16.msra.mxu0 0
        %867 = vmatprep.subr.bf16.mxu0 0
        %868 = vmatpush1.bf16.msra.mxu0 0
        %869 = vmatprep.subr.bf16.mxu0 0
        %870 = vmatpush1.bf16.msra.mxu0 %v853
        %871 = vmatprep.subr.bf16.mxu0 0
        %872 = vmatpush2.bf16.msra.mxu0 0
        %873 = vmatprep.subr.bf16.mxu0 0
        %874 = vmatpush2.bf16.msra.mxu0 0
        %875 = vmatprep.subr.bf16.mxu0 0
        %876 = vmatpush2.bf16.msra.mxu0 0
        %877 = vmatprep.subr.bf16.mxu0 0
        %878 = vmatpush2.bf16.msra.mxu0 0
        %879 = vmatprep.subr.bf16.mxu0 0
        %880 = vmatpush2.bf16.msra.mxu0 0
        %881 = vmatprep.subr.bf16.mxu0 0
        %882 = vmatpush2.bf16.msra.mxu0 0
        %883 = vmatprep.subr.bf16.mxu0 0
        %884 = vmatpush2.bf16.msra.mxu0 0
        %885 = vmatprep.subr.bf16.mxu0 0
        %886 = vmatpush2.bf16.msra.mxu0 0
        %887 = vmatprep.mubr.bf16.mxu0 0
        %888 = vmatmul.mubr.bf16.gmra.mxu0 %v849
        %v889 = vpop.f32.mrf.mxu0
        %v890 = vadd.f32 0.0, %v889
        %v891 = vpop.f32.mrf.mxu0
        %v892 = vpop.f32.mrf.mxu0
        %v893 = vpop.f32.mrf.mxu0
        %894 = vdwg.mxu0
        %v896 = vsel %vm847, %v840, 0
        %v899 = vsel %vm851, %v844, 0
        %901 = vmatprep.subr.bf16.mxu0 0
        %902 = vmatpush1.bf16.msra.mxu0 0
        %903 = vmatprep.subr.bf16.mxu0 0
        %904 = vmatpush1.bf16.msra.mxu0 0
        %905 = vmatprep.subr.bf16.mxu0 0
        %906 = vmatpush1.bf16.msra.mxu0 0
        %907 = vmatprep.subr.bf16.mxu0 0
        %908 = vmatpush1.bf16.msra.mxu0 0
        %909 = vmatprep.subr.bf16.mxu0 0
        %910 = vmatpush1.bf16.msra.mxu0 0
        %911 = vmatprep.subr.bf16.mxu0 0
        %912 = vmatpush1.bf16.msra.mxu0 0
        %913 = vmatprep.subr.bf16.mxu0 0
        %914 = vmatpush1.bf16.msra.mxu0 0
        %915 = vmatprep.subr.bf16.mxu0 0
        %916 = vmatpush1.bf16.msra.mxu0 %v899
        %917 = vmatprep.subr.bf16.mxu0 0
        %918 = vmatpush2.bf16.msra.mxu0 0
        %919 = vmatprep.subr.bf16.mxu0 0
        %920 = vmatpush2.bf16.msra.mxu0 0
        %921 = vmatprep.subr.bf16.mxu0 0
        %922 = vmatpush2.bf16.msra.mxu0 0
        %923 = vmatprep.subr.bf16.mxu0 0
        %924 = vmatpush2.bf16.msra.mxu0 0
        %925 = vmatprep.subr.bf16.mxu0 0
        %926 = vmatpush2.bf16.msra.mxu0 0
        %927 = vmatprep.subr.bf16.mxu0 0
        %928 = vmatpush2.bf16.msra.mxu0 0
        %929 = vmatprep.subr.bf16.mxu0 0
        %930 = vmatpush2.bf16.msra.mxu0 0
        %931 = vmatprep.subr.bf16.mxu0 0
        %932 = vmatpush2.bf16.msra.mxu0 0
        %933 = vmatprep.mubr.bf16.mxu0 0
        %934 = vmatmul.mubr.bf16.gmra.mxu0 %v896
        %v935 = vpop.f32.mrf.mxu0
        %v936 = vadd.f32 0.0, %v935
        %v937 = vpop.f32.mrf.mxu0
        %v938 = vpop.f32.mrf.mxu0
        %v939 = vpop.f32.mrf.mxu0
        %940 = vdwg.mxu0
        %v942 = vsel %vm847, %v841, 0
        %v945 = vsel %vm851, %v845, 0
        %947 = vmatprep.subr.bf16.mxu0 0
        %948 = vmatpush1.bf16.msra.mxu0 0
        %949 = vmatprep.subr.bf16.mxu0 0
        %950 = vmatpush1.bf16.msra.mxu0 0
        %951 = vmatprep.subr.bf16.mxu0 0
        %952 = vmatpush1.bf16.msra.mxu0 0
        %953 = vmatprep.subr.bf16.mxu0 0
        %954 = vmatpush1.bf16.msra.mxu0 0
        %955 = vmatprep.subr.bf16.mxu0 0
        %956 = vmatpush1.bf16.msra.mxu0 0
        %957 = vmatprep.subr.bf16.mxu0 0
        %958 = vmatpush1.bf16.msra.mxu0 0
        %959 = vmatprep.subr.bf16.mxu0 0
        %960 = vmatpush1.bf16.msra.mxu0 0
        %961 = vmatprep.subr.bf16.mxu0 0
        %962 = vmatpush1.bf16.msra.mxu0 %v945
        %963 = vmatprep.subr.bf16.mxu0 0
        %964 = vmatpush2.bf16.msra.mxu0 0
        %965 = vmatprep.subr.bf16.mxu0 0
        %966 = vmatpush2.bf16.msra.mxu0 0
        %967 = vmatprep.subr.bf16.mxu0 0
        %968 = vmatpush2.bf16.msra.mxu0 0
        %969 = vmatprep.subr.bf16.mxu0 0
        %970 = vmatpush2.bf16.msra.mxu0 0
        %971 = vmatprep.subr.bf16.mxu0 0
        %972 = vmatpush2.bf16.msra.mxu0 0
        %973 = vmatprep.subr.bf16.mxu0 0
        %974 = vmatpush2.bf16.msra.mxu0 0
        %975 = vmatprep.subr.bf16.mxu0 0
        %976 = vmatpush2.bf16.msra.mxu0 0
        %977 = vmatprep.subr.bf16.mxu0 0
        %978 = vmatpush2.bf16.msra.mxu0 0
        %979 = vmatprep.mubr.bf16.mxu0 0
        %980 = vmatmul.mubr.bf16.gmra.mxu0 %v942
        %v981 = vpop.f32.mrf.mxu0
        %v982 = vadd.f32 0.0, %v981
        %v983 = vpop.f32.mrf.mxu0
        %v984 = vpop.f32.mrf.mxu0
        %v985 = vpop.f32.mrf.mxu0
        %986 = vdwg.mxu0
        %v988 = vsel %vm847, %v842, 0
        %v991 = vsel %vm851, %v846, 0
        %993 = vmatprep.subr.bf16.mxu0 0
        %994 = vmatpush1.bf16.msra.mxu0 0
        %995 = vmatprep.subr.bf16.mxu0 0
        %996 = vmatpush1.bf16.msra.mxu0 0
        %997 = vmatprep.subr.bf16.mxu0 0
        %998 = vmatpush1.bf16.msra.mxu0 0
        %999 = vmatprep.subr.bf16.mxu0 0
        %1000 = vmatpush1.bf16.msra.mxu0 0
        %1001 = vmatprep.subr.bf16.mxu0 0
        %1002 = vmatpush1.bf16.msra.mxu0 0
        %1003 = vmatprep.subr.bf16.mxu0 0
        %1004 = vmatpush1.bf16.msra.mxu0 0
        %1005 = vmatprep.subr.bf16.mxu0 0
        %1006 = vmatpush1.bf16.msra.mxu0 0
        %1007 = vmatprep.subr.bf16.mxu0 0
        %1008 = vmatpush1.bf16.msra.mxu0 %v991
        %1009 = vmatprep.subr.bf16.mxu0 0
        %1010 = vmatpush2.bf16.msra.mxu0 0
        %1011 = vmatprep.subr.bf16.mxu0 0
        %1012 = vmatpush2.bf16.msra.mxu0 0
        %1013 = vmatprep.subr.bf16.mxu0 0
        %1014 = vmatpush2.bf16.msra.mxu0 0
        %1015 = vmatprep.subr.bf16.mxu0 0
        %1016 = vmatpush2.bf16.msra.mxu0 0
        %1017 = vmatprep.subr.bf16.mxu0 0
        %1018 = vmatpush2.bf16.msra.mxu0 0
        %1019 = vmatprep.subr.bf16.mxu0 0
        %1020 = vmatpush2.bf16.msra.mxu0 0
        %1021 = vmatprep.subr.bf16.mxu0 0
        %1022 = vmatpush2.bf16.msra.mxu0 0
        %1023 = vmatprep.subr.bf16.mxu0 0
        %1024 = vmatpush2.bf16.msra.mxu0 0
        %1025 = vmatprep.mubr.bf16.mxu0 0
        %1026 = vmatmul.mubr.bf16.gmra.mxu0 %v988
        %v1027 = vpop.f32.mrf.mxu0
        %v1028 = vadd.f32 0.0, %v1027
        %v1029 = vpop.f32.mrf.mxu0
        %v1030 = vpop.f32.mrf.mxu0
        %v1031 = vpop.f32.mrf.mxu0
        %1032 = vdwg.mxu0
        %v1033 = vld [vmem:[%s4] sm:$0xf]
        %v1034 = vld [vmem:[%s4 + $0x4] sm:$0xf]
        %v1035 = vld [vmem:[%s4 + $0x8] sm:$0xf]
        %v1036 = vld [vmem:[%s4 + $0xc] sm:$0xf]
        %v1037 = vpack.c.bf16 %v936, %v890
        %v1038 = vpack.c.bf16 %v1028, %v982
        %v1039 = vld [vmem:[%s5] sm:$0xff]
        %v1040 = vld [vmem:[%s5 + $0x8] sm:$0xff]
        %v1041 = vld [vmem:[%s5 + $0x10] sm:$0xff]
        %v1042 = vld [vmem:[%s5 + $0x18] sm:$0xff]
        %1044 = vset.pattern.permute.xlu0 0
        %1045 = vperm.xlu0 %1044, %v1039
        %v1046 = vpop.permute.xlu0 %1045
        %1049 = vset.pattern.permute.xlu0 0
        %1050 = vperm.xlu0 %1049, %v1040
        %v1051 = vpop.permute.xlu0 %1050
        %1054 = vset.pattern.permute.xlu0 0
        %1055 = vperm.xlu0 %1054, %v1041
        %v1056 = vpop.permute.xlu0 %1055
        %1059 = vset.pattern.permute.xlu0 0
        %1060 = vperm.xlu0 %1059, %v1042
        %v1061 = vpop.permute.xlu0 %1060
        %v1067 = vunpack.c.l.b16 %v1033
        %v1068 = vunpack.c.l.b16 %v1034
        %v1069 = vunpack.c.l.b16 %v1035
        %v1070 = vunpack.c.l.b16 %v1036
        %v1071 = vpack.c.b16 %v1068, %v1067
        %v1072 = vpack.c.b16 %v1070, %v1069
        %v1074 = vsel %vm528, %v1071, 0
        %v1077 = vsel %vm528, %v1072, 0
        %1079 = vmatprep.subr.bf16.mxu0 0
        %1080 = vmatpush1.bf16.msra.mxu0 0
        %1081 = vmatprep.subr.bf16.mxu0 0
        %1082 = vmatpush1.bf16.msra.mxu0 0
        %1083 = vmatprep.subr.bf16.mxu0 0
        %1084 = vmatpush1.bf16.msra.mxu0 0
        %1085 = vmatprep.subr.bf16.mxu0 0
        %1086 = vmatpush1.bf16.msra.mxu0 0
        %1087 = vmatprep.subr.bf16.mxu0 0
        %1088 = vmatpush1.bf16.msra.mxu0 0
        %1089 = vmatprep.subr.bf16.mxu0 0
        %1090 = vmatpush1.bf16.msra.mxu0 0
        %1091 = vmatprep.subr.bf16.mxu0 0
        %1092 = vmatpush1.bf16.msra.mxu0 %v1038
        %1093 = vmatprep.subr.bf16.mxu0 0
        %1094 = vmatpush1.bf16.msra.mxu0 %v1037
        %1095 = vmatprep.subr.bf16.mxu0 0
        %1096 = vmatpush2.bf16.msra.mxu0 0
        %1097 = vmatprep.subr.bf16.mxu0 0
        %1098 = vmatpush2.bf16.msra.mxu0 0
        %1099 = vmatprep.subr.bf16.mxu0 0
        %1100 = vmatpush2.bf16.msra.mxu0 0
        %1101 = vmatprep.subr.bf16.mxu0 0
        %1102 = vmatpush2.bf16.msra.mxu0 0
        %1103 = vmatprep.subr.bf16.mxu0 0
        %1104 = vmatpush2.bf16.msra.mxu0 0
        %1105 = vmatprep.subr.bf16.mxu0 0
        %1106 = vmatpush2.bf16.msra.mxu0 0
        %1107 = vmatprep.subr.bf16.mxu0 0
        %1108 = vmatpush2.bf16.msra.mxu0 0
        %1109 = vmatprep.subr.bf16.mxu0 0
        %1110 = vmatpush2.bf16.msra.mxu0 0
        %1111 = vmatprep.mubr.bf16.mxu0 0
        %1112 = vmatmul.mubr.bf16.gmra.mxu0 %v1074
        %v1113 = vpop.f32.mrf.mxu0
        %v1114 = vadd.f32 %v1046, %v1113
        %v1115 = vpop.f32.mrf.mxu0
        %v1116 = vpop.f32.mrf.mxu0
        %v1117 = vadd.f32 %v1051, %v1116
        %v1118 = vpop.f32.mrf.mxu0
        %1119 = vmatprep.mubr.bf16.mxu0 0
        %1120 = vmatmul.mubr.bf16.gmra.mxu0 %v1077
        %v1121 = vpop.f32.mrf.mxu0
        %v1122 = vadd.f32 %v1056, %v1121
        %v1123 = vpop.f32.mrf.mxu0
        %v1124 = vpop.f32.mrf.mxu0
        %v1125 = vadd.f32 %v1061, %v1124
        %v1126 = vpop.f32.mrf.mxu0
        %1127 = vdwg.mxu0
        %1128 = vst [vmem:[%s244] sm:$0xff] %v1114
        %1129 = vst [vmem:[%s244 + $0x8] sm:$0xff] %v1117
        %1130 = vst [vmem:[%s244 + $0x10] sm:$0xff] %v1122
        %1131 = vst [vmem:[%s244 + $0x18] sm:$0xff] %v1125
        %s1132 = sand.u32 %s159, 1
        %s1133 = scalar_lea.sflag [#allocation3], %s1132
        %s1134 = sand.u32 %s159, 1
        %s1135 = smul.addr %s1134, 32
        %s1136 = scalar_lea.vmem [#allocation2], %s1135
        // Predicated region
        $region45: #{tpu_custom_call.1} parent=43 // pred_check
          %p1137 = pneg %p169
        $region46: #{tpu_custom_call.1} parent=43 // pred_check_branch
          %1139 = sbr.rel (%p1137) target = $region48
        $region47: #{tpu_custom_call.1} parent=43 // pred_region
          %s1141 = ssub.s32 512, 512
          %1142 = vsyncadd %s1133, %s1141
          %s1143 = smul.addr %s20, 4
          %s1144 = smul.addr %s1143, 128
          %s1145 = scalar_lea.hbm %s6, %s1144
          %s1146 = sshll.u32 %s1136, 4
          %s1147 = int_to_ptr.vmem [resolvable:$true] %s1146
          %1152 = dma.vmem_to_hbm [thread:$0]  %s1147, 512, %s1145, %s1133, 128, 128, 8
        $region48: #{tpu_custom_call.1} parent=43 // pred_fallthru
          _
      $region44: #{tpu_custom_call.1} parent=5 // pred_fallthru
        _
      %p1153 = scmp.le.s32.totalorder 2, %s15
      // Predicated region
      $region49: #{tpu_custom_call.1} parent=5 // pred_check
        %p1154 = pneg %p1153
      $region50: #{tpu_custom_call.1} parent=5 // pred_check_branch
        %1156 = sbr.rel (%p1154) target = $region52
      $region51: #{tpu_custom_call.1} parent=5 // pred_region
        %s1157 = ssub.s32 %s15, 2
        // Predicated region
        $region53: #{tpu_custom_call.1} parent=51 // pred_check
          %p1158 = pneg %p175
        $region54: #{tpu_custom_call.1} parent=51 // pred_check_branch
          %1160 = sbr.rel (%p1158) target = $region56
        $region55: #{tpu_custom_call.1} parent=51 // pred_region
          %s1161 = sand.u32 %s160, 1
          %s1162 = scalar_lea.sflag [#allocation3], %s1161
          %s1163 = sand.u32 %s160, 1
          %s1164 = smul.addr %s1163, 32
          %s1165 = scalar_lea.vmem [#allocation2], %s1164
          %1166 = dma.done %s1162, 512
        $region56: #{tpu_custom_call.1} parent=51 // pred_fallthru
          _
      $region52: #{tpu_custom_call.1} parent=5 // pred_fallthru
        _
    $region6: #{tpu_custom_call.1} parent=1 // loop_footer
      %s19 = sadd.s32 1, %s15
    $region7: #{tpu_custom_call.1} parent=1 // loop_footer_branch
      %14 = sbr.rel target = $region3
    $region8: #{tpu_custom_call.1} parent=1 // loop_exit
      _
    %1167 = vsyncpa [#allocation3], 1
    %s1168 = scalar_lea.sflag [#allocation3], 1
    %1169 = vsyncpa %s1168, 1

</llo_original>
